<compile_context>
chip_gen: v6e
topology: v6e:2x2x1
jax: 0.10.0
libtpu: 0.0.40
codegen_flags: <defaults>
</compile_context>

<pallas_src>
import jax
import jax.numpy as jnp
from jax.experimental import pallas as pl
from jax.experimental.pallas import tpu as pltpu


def _encoder_kernel(x_ref, w1_ref, b1_ref, w2_ref, b2_ref, o_ref):
    # x_ref : (F, TT)   one batch element's [mel-bins, time-tile] slab (native layout)
    # w1_ref: (H, F) bf16    b1_ref: (H, 1) f32
    # w2_ref: (H, H) bf16    b2_ref: (H, 1) f32
    # o_ref : (H, TT)        channel-major output tile (NeMo encoder_out layout)
    x = x_ref[...].astype(jnp.bfloat16)      # ".float()" folded into the compute cast
    # Standard-orientation MXU matmuls (weights pre-transposed at init): no XLU
    # transpose, lane-dense (tile_t-wide) intermediates and output.
    h = jnp.dot(w1_ref[...], x, preferred_element_type=jnp.float32)
    h = jnp.maximum(h + b1_ref[...], 0.0)                     # bias + ReLU in f32
    o = jnp.dot(w2_ref[...], h.astype(jnp.bfloat16),
                preferred_element_type=jnp.float32)
    o_ref[...] = (o + b2_ref[...]).astype(o_ref.dtype)


def _pick_time_tile(B, T, max_tile_t):
    """Lane-aligned time tile; guarantees >=2 parallel grid steps when possible (v7x)."""
    tile_t = T if T <= max_tile_t else max_tile_t
    # v7x has 2 TensorCores per chip: if the grid would collapse to a single step
    # (B == 1 and one time tile), split the time axis on a 128-lane boundary.
    if B * pl.cdiv(T, tile_t) < 2 and T >= 256:
        tile_t = ((T + 1) // 2 + 127) // 128 * 128
    return tile_t


def _run_encoder(s_bft, w1, b1, w2, b2, *, out_dtype=jnp.float32, max_tile_t=1024):
    B, F, T = s_bft.shape
    H = w1.shape[0]
    tile_t = _pick_time_tile(B, T, max_tile_t)
    grid = (B, pl.cdiv(T, tile_t))

    # Advisory cost estimate: memory-bound streaming kernel (~65 FLOP/byte at f32 I/O).
    flops = 2 * B * T * (F * H + H * H)
    bytes_accessed = (
        s_bft.size * s_bft.dtype.itemsize
        + B * H * T * jnp.dtype(out_dtype).itemsize
        + w1.size * w1.dtype.itemsize + w2.size * w2.dtype.itemsize
        + b1.size * b1.dtype.itemsize + b2.size * b2.dtype.itemsize
    )
    cost = pl.CostEstimate(flops=flops, transcendentals=0,
                           bytes_accessed=bytes_accessed)

    return pl.pallas_call(
        _encoder_kernel,
        out_shape=jax.ShapeDtypeStruct((B, H, T), out_dtype),
        grid_spec=pltpu.PrefetchScalarGridSpec(
            num_scalar_prefetch=0,
            grid=grid,
            in_specs=[
                # Native [B, F, T] layout -> no XLA transpose before the kernel.
                # (Optionally add pipeline_mode=pl.Buffered(3) here if profiling still
                #  shows exposed input DMA after the larger time tiles.)
                pl.BlockSpec((None, F, tile_t), lambda b, t: (b, 0, t)),
                # Weights/biases: grid-invariant tiles.
                pl.BlockSpec((H, F), lambda b, t: (0, 0)),
                pl.BlockSpec((H, 1), lambda b, t: (0, 0)),
                pl.BlockSpec((H, H), lambda b, t: (0, 0)),
                pl.BlockSpec((H, 1), lambda b, t: (0, 0)),
            ],
            out_specs=pl.BlockSpec((None, H, tile_t), lambda b, t: (b, 0, t)),
        ),
        compiler_params=pltpu.CompilerParams(
            dimension_semantics=("parallel", "parallel"),
            # Larger time tiles stay well under this; 32 MiB also clears v5e's 16 MiB
            # default scoped VMEM and leaves headroom under v7x's 64 MiB physical VMEM.
            vmem_limit_bytes=32 * 1024 * 1024,
        ),
        cost_estimate=cost,
    )(s_bft, w1, b1, w2, b2)


def processor_forward(S, params, *, out_dtype=jnp.float32, max_tile_t=1024):
    """Mirror of Processor.forward.

    S: [B, 1, F, T] spectrogram (f32 or bf16).
    Returns encoder_out: [B, H, T] (channel-major, like NeMo encoder_out).
    """
    # S = S.squeeze(1).float()  (the compute-dtype cast is fused into the kernel)
    S = jnp.squeeze(S, axis=1)                         # [B, F, T]
    B, _, T = S.shape
    # input_lengths = torch.full((B,), T, dtype=int64)  -- mirrored but unused by the
    # synthetic encoder (all frames are valid); int32 since TPU has no native int64.
    input_lengths = jnp.full((B,), T, dtype=jnp.int32)
    del input_lengths
    return _run_encoder(S, *params, out_dtype=out_dtype, max_tile_t=max_tile_t)


def init_params(F, H):
    """Deterministic synthetic encoder weights.

    Stored pre-transposed (output-major) so the kernel's matmuls are standard
    orientation: w1 (H, F) bf16, w2 (H, H) bf16, biases (H, 1) f32.
    """
    k1, k2 = jax.random.split(jax.random.PRNGKey(42))
    w1 = (jax.random.normal(k1, (H, F), dtype=jnp.float32) / jnp.sqrt(F)).astype(jnp.bfloat16)
    b1 = jnp.zeros((H, 1), dtype=jnp.float32)
    w2 = (jax.random.normal(k2, (H, H), dtype=jnp.float32) / jnp.sqrt(H)).astype(jnp.bfloat16)
    b2 = jnp.zeros((H, 1), dtype=jnp.float32)
    return (w1, b1, w2, b2)


def reference_forward(S, params):
    """Pure-JAX reference (same bf16-input / f32-accumulate numerics as the kernel)."""
    w1, b1, w2, b2 = params
    x = jnp.squeeze(S, axis=1).astype(jnp.bfloat16)                       # [B, F, T]
    h = jnp.einsum("hf,bft->bht", w1, x,
                   preferred_element_type=jnp.float32) + b1[None, ...]
    h = jnp.maximum(h, 0.0)
    o = jnp.einsum("kh,bht->bkt", w2, h.astype(jnp.bfloat16),
                   preferred_element_type=jnp.float32) + b2[None, ...]
    return o                                                              # [B, H, T]


if __name__ == "__main__":
    # Small but lane-aligned shapes: batch=2, mel-bins F=128, time T=128, hidden H=128.
    B, F, T, H = 2, 128, 128, 128
    key = jax.random.PRNGKey(0)
    S = jax.random.normal(key, (B, 1, F, T), dtype=jnp.float32)    # [B, 1, F, T] spectrogram

    params = init_params(F, H)

    out = processor_forward(S, params)            # f32 output (pass out_dtype=bf16 to halve writes)
    out = jax.block_until_ready(out)

    ref = reference_forward(S, params)
    assert out.shape == (B, H, T), out.shape
    assert jnp.allclose(out, ref, atol=2e-2, rtol=2e-2), "mismatch vs reference"

    print("KERNEL_OK")
</pallas_src>

<mosaic_0001>
module attributes {stable_mosaic.version = 11 : i64} {
  func.func @_encoder_kernel(%arg0: i32, %arg1: i32, %arg2: memref<1x128x128xf32, #tpu.memory_space<vmem>>, %arg3: memref<128x128xbf16, #tpu.memory_space<vmem>>, %arg4: memref<128x1xf32, #tpu.memory_space<vmem>>, %arg5: memref<128x128xbf16, #tpu.memory_space<vmem>>, %arg6: memref<128x1xf32, #tpu.memory_space<vmem>>, %arg7: memref<1x128x128xf32, #tpu.memory_space<vmem>>) attributes {dimension_semantics = [#tpu.dimension_semantics<parallel>, #tpu.dimension_semantics<parallel>], iteration_bounds = array<i64: 2, 1>, scalar_prefetch = 0 : i64, scratch_operands = 0 : i64, tpu.core_type = #tpu.core_type<tc>, window_params = [{transform_indices = @transform_0, window_bounds = array<i64: 1, 128, 128>}, {pipeline_mode = #tpu.pipeline_mode<synchronous>, transform_indices = @transform_1, window_bounds = array<i64: 128, 128>}, {pipeline_mode = #tpu.pipeline_mode<synchronous>, transform_indices = @transform_2, window_bounds = array<i64: 128, 1>}, {pipeline_mode = #tpu.pipeline_mode<synchronous>, transform_indices = @transform_3, window_bounds = array<i64: 128, 128>}, {pipeline_mode = #tpu.pipeline_mode<synchronous>, transform_indices = @transform_4, window_bounds = array<i64: 128, 1>}, {transform_indices = @transform_5, window_bounds = array<i64: 1, 128, 128>}]} {
    %c0 = arith.constant 0 : index
    %c0_0 = arith.constant 0 : index
    %c0_1 = arith.constant 0 : index
    %0 = vector.load %arg2[%c0, %c0_0, %c0_1] : memref<1x128x128xf32, #tpu.memory_space<vmem>>, vector<1x128x128xf32>
    %1 = vector.shape_cast %0 : vector<1x128x128xf32> to vector<128x128xf32>
    %2 = arith.truncf %1 : vector<128x128xf32> to vector<128x128xbf16>
    %c0_2 = arith.constant 0 : index
    %c0_3 = arith.constant 0 : index
    %3 = vector.load %arg3[%c0_2, %c0_3] : memref<128x128xbf16, #tpu.memory_space<vmem>>, vector<128x128xbf16>
    %cst = arith.constant dense<0.000000e+00> : vector<128x128xf32>
    %4 = tpu.matmul %3, %2, %cst {dimension_numbers = #tpu.dot_dimension_numbers<[1], [0], [0], [1], [0, 0, 1, 1], [], []>} : vector<128x128xbf16>, vector<128x128xbf16>, vector<128x128xf32> -> vector<128x128xf32>
    %c0_4 = arith.constant 0 : index
    %c0_5 = arith.constant 0 : index
    %5 = vector.load %arg4[%c0_4, %c0_5] : memref<128x1xf32, #tpu.memory_space<vmem>>, vector<128x1xf32>
    %6 = vector.broadcast %5 : vector<128x1xf32> to vector<128x128xf32>
    %7 = arith.addf %4, %6 : vector<128x128xf32>
    %cst_6 = arith.constant 0.000000e+00 : f32
    %8 = vector.broadcast %cst_6 : f32 to vector<128x128xf32>
    %9 = arith.maximumf %7, %8 : vector<128x128xf32>
    %c0_7 = arith.constant 0 : index
    %c0_8 = arith.constant 0 : index
    %10 = vector.load %arg5[%c0_7, %c0_8] : memref<128x128xbf16, #tpu.memory_space<vmem>>, vector<128x128xbf16>
    %11 = arith.truncf %9 : vector<128x128xf32> to vector<128x128xbf16>
    %cst_9 = arith.constant dense<0.000000e+00> : vector<128x128xf32>
    %12 = tpu.matmul %10, %11, %cst_9 {dimension_numbers = #tpu.dot_dimension_numbers<[1], [0], [0], [1], [0, 0, 1, 1], [], []>} : vector<128x128xbf16>, vector<128x128xbf16>, vector<128x128xf32> -> vector<128x128xf32>
    %c0_10 = arith.constant 0 : index
    %c0_11 = arith.constant 0 : index
    %13 = vector.load %arg6[%c0_10, %c0_11] : memref<128x1xf32, #tpu.memory_space<vmem>>, vector<128x1xf32>
    %14 = vector.broadcast %13 : vector<128x1xf32> to vector<128x128xf32>
    %15 = arith.addf %12, %14 : vector<128x128xf32>
    %c0_12 = arith.constant 0 : index
    %c0_13 = arith.constant 0 : index
    %c0_14 = arith.constant 0 : index
    %16 = vector.load %arg7[%c0_12, %c0_13, %c0_14] : memref<1x128x128xf32, #tpu.memory_space<vmem>>, vector<1x128x128xf32>
    %17 = vector.shape_cast %16 : vector<1x128x128xf32> to vector<128x128xf32>
    %18 = vector.shape_cast %15 : vector<128x128xf32> to vector<1x128x128xf32>
    tpu.vector_store %arg7[%c0_12, %c0_13, %c0_14], %18 {strides = array<i32>} : memref<1x128x128xf32, #tpu.memory_space<vmem>>, vector<1x128x128xf32>,
    return
  }
  func.func @transform_0(%arg0: i32, %arg1: i32) -> (i32, i32, i32) {
    %c0_i32 = arith.constant 0 : i32
    %c0_i32_0 = arith.constant 0 : i32
    return %arg0, %c0_i32, %arg1 : i32, i32, i32
  }
  func.func @transform_1(%arg0: i32, %arg1: i32) -> (i32, i32) {
    %c0_i32 = arith.constant 0 : i32
    %c0_i32_0 = arith.constant 0 : i32
    %c0_i32_1 = arith.constant 0 : i32
    return %c0_i32, %c0_i32_0 : i32, i32
  }
  func.func @transform_2(%arg0: i32, %arg1: i32) -> (i32, i32) {
    %c0_i32 = arith.constant 0 : i32
    %c0_i32_0 = arith.constant 0 : i32
    %c0_i32_1 = arith.constant 0 : i32
    return %c0_i32, %c0_i32_0 : i32, i32
  }
  func.func @transform_3(%arg0: i32, %arg1: i32) -> (i32, i32) {
    %c0_i32 = arith.constant 0 : i32
    %c0_i32_0 = arith.constant 0 : i32
    %c0_i32_1 = arith.constant 0 : i32
    return %c0_i32, %c0_i32_0 : i32, i32
  }
  func.func @transform_4(%arg0: i32, %arg1: i32) -> (i32, i32) {
    %c0_i32 = arith.constant 0 : i32
    %c0_i32_0 = arith.constant 0 : i32
    %c0_i32_1 = arith.constant 0 : i32
    return %c0_i32, %c0_i32_0 : i32, i32
  }
  func.func @transform_5(%arg0: i32, %arg1: i32) -> (i32, i32, i32) {
    %c0_i32 = arith.constant 0 : i32
    %c0_i32_0 = arith.constant 0 : i32
    return %arg0, %c0_i32, %arg1 : i32, i32, i32
  }
}

</mosaic_0001>

<llo_original>
// kernel: tpu_custom_call.1
$region0: #{tpu_custom_call.1}
  #allocation0 [shape = 'u32[]', space=smem, size = 0x4, offset = 0x4, fixed_abs, tag = 'smem constant byte address 0x4 - core index']
  #allocation1 [shape = 'u32[144,128]{1,0:T(1,128)}', space=vmem, size = 0x12000, scoped, tag = 'internal scratch']
  %s0 = inlined_call_operand.vmem [shape: f32[2,128,128], index: 0, kind: input, shape index: {}]
  %s1 = inlined_call_operand.hbm [shape: bf16[128,128], index: 1, kind: input, shape index: {}]
  %s2 = inlined_call_operand.vmem [shape: f32[128,1], index: 2, kind: input, shape index: {}]
  %s3 = inlined_call_operand.hbm [shape: bf16[128,128], index: 3, kind: input, shape index: {}]
  %s4 = inlined_call_operand.vmem [shape: f32[128,1], index: 4, kind: input, shape index: {}]
  %s5 = inlined_call_operand.hbm [shape: f32[2,128,128], index: 5, kind: output, shape index: {}]
  %s6 = sld [smem:[#allocation0]]
  $region61: #{tpu_custom_call.1} parent=0
    _
  %s8 = ssub.s32 1, %s6
  %s9 = scalar_select 0, %s8, %s6
  $region1: #{tpu_custom_call.1} parent=0
    #allocation2 [shape = 'u8[32768]{0}', space=vmem, size = 0x8000, scoped, tag = 'input window, operand 1, single buffered']
    #allocation3 [shape = 's32[2]{0}', space=sflag, size = 0x8, scoped, tag = 'scoped memory for tpu_custom_call.1']
    #allocation4 [shape = 's32[2]{0}', space=sflag, size = 0x8, scoped, tag = 'scoped memory for tpu_custom_call.1']
    #allocation5 [shape = 'u8[32768]{0}', space=vmem, size = 0x8000, scoped, tag = 'input window, operand 3, single buffered']
    #allocation6 [shape = 's32[1]{0}', space=sflag, size = 0x4, scoped, tag = 'scoped memory for tpu_custom_call.1']
    #allocation7 [shape = 'u8[131072]{0}', space=vmem, size = 0x20000, scoped, tag = 'output window, operand 0']
    %10 = vsyncpa [#allocation3], 0
    %11 = vsyncpa [#allocation6], 0
    %12 = vsyncpa [#allocation4], 0
    %s13 = scalar_lea.sflag [#allocation4], 1
    %14 = vsyncpa %s13, 0
    loop: start=0, step=1, limit=4
    $region2: #{tpu_custom_call.1} parent=1 // loop_pre_header
      _
    $region3: #{tpu_custom_call.1} parent=1 // loop_header
      %s16 = sphi 0, %s20
      %p17 = scmp.ge.s32.totalorder %s16, 4
      %s23 = sphi 0, %s35
      %s24 = sphi 0, %s31
      %s25 = sphi 0, %s23
      %s26 = sphi 0, %s24
      %s27 = sphi 0, %s25
      %s28 = sphi 0, %s26
      %s40 = sphi 0, %s42
      %s43 = sphi 0, %s40
      %s44 = sphi 0, %s43
      %s60 = sphi 0, %s44
      %s64 = sphi 0, %s64
      %s66 = sphi 0, %s64
      %s67 = sphi 0, %s66
      %s81 = sphi 0, %s67
      %s85 = sphi 0, %s85
      %s87 = sphi 0, %s85
      %s88 = sphi 0, %s87
      %s102 = sphi 0, %s88
      %s106 = sphi 0, %s106
      %s108 = sphi 0, %s106
      %s109 = sphi 0, %s108
      %s123 = sphi 0, %s109
      %s127 = sphi 0, %s127
      %s129 = sphi 0, %s127
      %s130 = sphi 0, %s129
      %s144 = sphi 0, %s130
      %s152 = sphi 0, %s154
      %s155 = sphi 0, %s152
      %s156 = sphi 0, %s155
      %s172 = sphi 0, %s156
    $region4: #{tpu_custom_call.1} parent=1 // loop_header_branch
      %19 = sbr.rel (%p17) target = $region8
    $region5: #{tpu_custom_call.1} parent=1 // loop_body
      %s21 = ssub.s32 %s16, 1
      %s22 = ssub.s32 %s16, 2
      %s29 = sadd.s32 1, %s24
      %p30 = scmp.ge.s32.totalorder %s29, 1
      %s31 = scalar_select %p30, 0, %s29
      %s32 = sadd.s32 1, %s23
      %s33 = scalar_select %p30, %s32, %s23
      %p34 = scmp.ge.s32.totalorder %s33, 2
      %s35 = scalar_select %p34, 0, %s33
      %s36 = ssub.s32 %s23, %s35
      %s37 = ssub.s32 %s24, %s31
      %s38 = sor.u32 %s36, %s37
      %p39 = scmp.eq.s32.totalorder %s38, 0
      %s41 = sadd.s32 %s40, 1
      %s42 = scalar_select %p39, %s40, %s41
      %p45 = pneg %p39
      %p46 = scmp.eq.s32.totalorder %s16, 1
      %p47 = por %p45, %p46
      %p48 = scmp.ne.s32.totalorder %s40, %s43
      %p49 = scmp.eq.s32.totalorder %s16, 0
      %p50 = por %p48, %p49
      %p51 = scmp.ne.s32.totalorder %s40, %s43
      %p52 = scmp.eq.s32.totalorder %s21, 1
      %p53 = por %p51, %p52
      %p54 = scmp.ne.s32.totalorder %s43, %s44
      %p55 = scmp.eq.s32.totalorder %s21, 0
      %p56 = por %p54, %p55
      %p57 = scmp.ne.s32.totalorder %s43, %s44
      %p58 = scmp.eq.s32.totalorder %s22, 1
      %p59 = por %p57, %p58
      %p61 = scmp.ne.s32.totalorder %s44, %s60
      %p62 = scmp.eq.s32.totalorder %s22, 0
      %p63 = por %p61, %p62
      %s65 = sadd.s32 %s64, 1
      %p68 = scmp.eq.s32.totalorder %s16, 1
      %p69 = scmp.ne.s32.totalorder %s64, %s66
      %p70 = scmp.eq.s32.totalorder %s16, 0
      %p71 = por %p69, %p70
      %p72 = scmp.ne.s32.totalorder %s64, %s66
      %p73 = scmp.eq.s32.totalorder %s21, 1
      %p74 = por %p72, %p73
      %p75 = scmp.ne.s32.totalorder %s66, %s67
      %p76 = scmp.eq.s32.totalorder %s21, 0
      %p77 = por %p75, %p76
      %p78 = scmp.ne.s32.totalorder %s66, %s67
      %p79 = scmp.eq.s32.totalorder %s22, 1
      %p80 = por %p78, %p79
      %p82 = scmp.ne.s32.totalorder %s67, %s81
      %p83 = scmp.eq.s32.totalorder %s22, 0
      %p84 = por %p82, %p83
      %s86 = sadd.s32 %s85, 1
      %p89 = scmp.eq.s32.totalorder %s16, 1
      %p90 = scmp.ne.s32.totalorder %s85, %s87
      %p91 = scmp.eq.s32.totalorder %s16, 0
      %p92 = por %p90, %p91
      %p93 = scmp.ne.s32.totalorder %s85, %s87
      %p94 = scmp.eq.s32.totalorder %s21, 1
      %p95 = por %p93, %p94
      %p96 = scmp.ne.s32.totalorder %s87, %s88
      %p97 = scmp.eq.s32.totalorder %s21, 0
      %p98 = por %p96, %p97
      %p99 = scmp.ne.s32.totalorder %s87, %s88
      %p100 = scmp.eq.s32.totalorder %s22, 1
      %p101 = por %p99, %p100
      %p103 = scmp.ne.s32.totalorder %s88, %s102
      %p104 = scmp.eq.s32.totalorder %s22, 0
      %p105 = por %p103, %p104
      %s107 = sadd.s32 %s106, 1
      %p110 = scmp.eq.s32.totalorder %s16, 1
      %p111 = scmp.ne.s32.totalorder %s106, %s108
      %p112 = scmp.eq.s32.totalorder %s16, 0
      %p113 = por %p111, %p112
      %p114 = scmp.ne.s32.totalorder %s106, %s108
      %p115 = scmp.eq.s32.totalorder %s21, 1
      %p116 = por %p114, %p115
      %p117 = scmp.ne.s32.totalorder %s108, %s109
      %p118 = scmp.eq.s32.totalorder %s21, 0
      %p119 = por %p117, %p118
      %p120 = scmp.ne.s32.totalorder %s108, %s109
      %p121 = scmp.eq.s32.totalorder %s22, 1
      %p122 = por %p120, %p121
      %p124 = scmp.ne.s32.totalorder %s109, %s123
      %p125 = scmp.eq.s32.totalorder %s22, 0
      %p126 = por %p124, %p125
      %s128 = sadd.s32 %s127, 1
      %p131 = scmp.eq.s32.totalorder %s16, 1
      %p132 = scmp.ne.s32.totalorder %s127, %s129
      %p133 = scmp.eq.s32.totalorder %s16, 0
      %p134 = por %p132, %p133
      %p135 = scmp.ne.s32.totalorder %s127, %s129
      %p136 = scmp.eq.s32.totalorder %s21, 1
      %p137 = por %p135, %p136
      %p138 = scmp.ne.s32.totalorder %s129, %s130
      %p139 = scmp.eq.s32.totalorder %s21, 0
      %p140 = por %p138, %p139
      %p141 = scmp.ne.s32.totalorder %s129, %s130
      %p142 = scmp.eq.s32.totalorder %s22, 1
      %p143 = por %p141, %p142
      %p145 = scmp.ne.s32.totalorder %s130, %s144
      %p146 = scmp.eq.s32.totalorder %s22, 0
      %p147 = por %p145, %p146
      %s148 = ssub.s32 %s23, %s35
      %s149 = ssub.s32 %s24, %s31
      %s150 = sor.u32 %s148, %s149
      %p151 = scmp.eq.s32.totalorder %s150, 0
      %s153 = sadd.s32 %s152, 1
      %s154 = scalar_select %p151, %s152, %s153
      %p157 = pneg %p151
      %p158 = scmp.eq.s32.totalorder %s16, 1
      %p159 = por %p157, %p158
      %p160 = scmp.ne.s32.totalorder %s152, %s155
      %p161 = scmp.eq.s32.totalorder %s16, 0
      %p162 = por %p160, %p161
      %p163 = scmp.ne.s32.totalorder %s152, %s155
      %p164 = scmp.eq.s32.totalorder %s21, 1
      %p165 = por %p163, %p164
      %p166 = scmp.ne.s32.totalorder %s155, %s156
      %p167 = scmp.eq.s32.totalorder %s21, 0
      %p168 = por %p166, %p167
      %p169 = scmp.ne.s32.totalorder %s155, %s156
      %p170 = scmp.eq.s32.totalorder %s22, 1
      %p171 = por %p169, %p170
      %p173 = scmp.ne.s32.totalorder %s156, %s172
      %p174 = scmp.eq.s32.totalorder %s22, 0
      %p175 = por %p173, %p174
      %p176 = scmp.le.s32.totalorder 1, %s16
      %p177 = scmp.lt.s32.totalorder %s16, 3
      %p178 = pnand %p176, %p177
      %p179 = pneg %p178
      // Predicated region
      $region9: #{tpu_custom_call.1} parent=5 // pred_check
        _
      $region10: #{tpu_custom_call.1} parent=5 // pred_check_branch
        %181 = sbr.rel (%p178) target = $region12
      $region11: #{tpu_custom_call.1} parent=5 // pred_region
        %s182 = ssub.s32 %s16, 1
        // Predicated region
        $region13: #{tpu_custom_call.1} parent=11 // pred_check
          %p183 = pneg %p77
        $region14: #{tpu_custom_call.1} parent=11 // pred_check_branch
          %185 = sbr.rel (%p183) target = $region16
        $region15: #{tpu_custom_call.1} parent=11 // pred_region
          %s187 = ssub.s32 1024, 1024
          %188 = vsyncadd [#allocation3], %s187
          %s189 = sshll.u32 [#allocation2], 4
          %s190 = int_to_ptr.vmem [resolvable:$true] %s189
          %195 = dma.hbm_to_vmem [thread:$0]  %s1, 1024, %s190, [#allocation3], 64, 64, 4
        $region16: #{tpu_custom_call.1} parent=11 // pred_fallthru
          _
        // Predicated region
        $region17: #{tpu_custom_call.1} parent=11 // pred_check
          %p196 = pneg %p98
        $region18: #{tpu_custom_call.1} parent=11 // pred_check_branch
          %198 = sbr.rel (%p196) target = $region20
        $region19: #{tpu_custom_call.1} parent=11 // pred_region
          _
        $region20: #{tpu_custom_call.1} parent=11 // pred_fallthru
          _
        // Predicated region
        $region21: #{tpu_custom_call.1} parent=11 // pred_check
          %p199 = pneg %p119
        $region22: #{tpu_custom_call.1} parent=11 // pred_check_branch
          %201 = sbr.rel (%p199) target = $region24
        $region23: #{tpu_custom_call.1} parent=11 // pred_region
          %s203 = ssub.s32 1024, 1024
          %204 = vsyncadd [#allocation6], %s203
          %s205 = sshll.u32 [#allocation5], 4
          %s206 = int_to_ptr.vmem [resolvable:$true] %s205
          %211 = dma.hbm_to_vmem [thread:$0]  %s3, 1024, %s206, [#allocation6], 64, 64, 4
        $region24: #{tpu_custom_call.1} parent=11 // pred_fallthru
          _
        // Predicated region
        $region25: #{tpu_custom_call.1} parent=11 // pred_check
          %p212 = pneg %p140
        $region26: #{tpu_custom_call.1} parent=11 // pred_check_branch
          %214 = sbr.rel (%p212) target = $region28
        $region27: #{tpu_custom_call.1} parent=11 // pred_region
          _
        $region28: #{tpu_custom_call.1} parent=11 // pred_fallthru
          _
      $region12: #{tpu_custom_call.1} parent=5 // pred_fallthru
        _
      %p215 = scmp.lt.s32.totalorder %s16, 2
      // Predicated region
      $region29: #{tpu_custom_call.1} parent=5 // pred_check
        %p216 = pneg %p215
      $region30: #{tpu_custom_call.1} parent=5 // pred_check_branch
        %218 = sbr.rel (%p216) target = $region32
      $region31: #{tpu_custom_call.1} parent=5 // pred_region
        // Predicated region
        $region33: #{tpu_custom_call.1} parent=31 // pred_check
          %p219 = pneg %p50
        $region34: #{tpu_custom_call.1} parent=31 // pred_check_branch
          %221 = sbr.rel (%p219) target = $region36
        $region35: #{tpu_custom_call.1} parent=31 // pred_region
          %p222 = scmp.lt.s32.totalorder %s23, 1
          %s223 = scalar_select %p222, %s23, 1
          %p224 = scmp.lt.s32.totalorder %s24, 0
          %s225 = scalar_select %p224, %s24, 0
          %s226 = smul.addr %s223, 16
          %s227 = sadd.s32 %s225, %s226
          %s228 = smul.addr %s227, 8
          %s229 = scalar_lea.vmem %s0, %s228
        $region36: #{tpu_custom_call.1} parent=31 // pred_fallthru
          _
      $region32: #{tpu_custom_call.1} parent=5 // pred_fallthru
        _
      %p230 = scmp.le.s32.totalorder 1, %s16
      %p231 = scmp.lt.s32.totalorder %s16, 3
      %p232 = pnand %p230, %p231
      %p233 = pneg %p232
      // Predicated region
      $region37: #{tpu_custom_call.1} parent=5 // pred_check
        _
      $region38: #{tpu_custom_call.1} parent=5 // pred_check_branch
        %235 = sbr.rel (%p232) target = $region40
      $region39: #{tpu_custom_call.1} parent=5 // pred_region
        %s236 = ssub.s32 %s16, 1
        // Predicated region
        $region41: #{tpu_custom_call.1} parent=39 // pred_check
          %p237 = pneg %p77
        $region42: #{tpu_custom_call.1} parent=39 // pred_check_branch
          %239 = sbr.rel (%p237) target = $region44
        $region43: #{tpu_custom_call.1} parent=39 // pred_region
          %240 = dma.done [#allocation3], 1024
        $region44: #{tpu_custom_call.1} parent=39 // pred_fallthru
          _
        // Predicated region
        $region45: #{tpu_custom_call.1} parent=39 // pred_check
          %p241 = pneg %p119
        $region46: #{tpu_custom_call.1} parent=39 // pred_check_branch
          %243 = sbr.rel (%p241) target = $region48
        $region47: #{tpu_custom_call.1} parent=39 // pred_region
          %244 = dma.done [#allocation6], 1024
        $region48: #{tpu_custom_call.1} parent=39 // pred_fallthru
          _
        %p245 = scmp.lt.s32.totalorder %s25, 1
        %s246 = scalar_select %p245, %s25, 1
        %p247 = scmp.lt.s32.totalorder %s26, 0
        %s248 = scalar_select %p247, %s26, 0
        %s249 = smul.addr %s246, 16
        %s250 = sadd.s32 %s248, %s249
        %s251 = smul.addr %s250, 8
        %s252 = scalar_lea.vmem %s0, %s251
        %p253 = pneg %p56
        %p254 = pneg %p53
        %p255 = pneg %p77
        %p256 = pneg %p74
        %p257 = pneg %p98
        %p258 = pneg %p95
        %p259 = pneg %p119
        %p260 = pneg %p116
        %p261 = pneg %p140
        %p262 = pneg %p137
        %p263 = pneg %p168
        %p264 = pneg %p165
        %s265 = sand.u32 %s155, 1
        %s266 = scalar_lea.sflag [#allocation4], %s265
        %s267 = sand.u32 %s155, 1
        %s268 = smul.addr %s267, 128
        %s269 = scalar_lea.vmem [#allocation7], %s268
        %p270 = scmp.lt.s32.totalorder %s25, 1
        %s271 = scalar_select %p270, %s25, 1
        %p272 = scmp.lt.s32.totalorder %s26, 0
        %s273 = scalar_select %p272, %s26, 0
        %s274 = smul.addr %s271, 16
        %s275 = sadd.s32 %s273, %s274
        %s276 = smul.addr %s275, 8
        %s277 = scalar_lea.vmem %s0, %s276
        %v279 = vld [vmem:[%s277] sm:$0xff]
        %v280 = vld [vmem:[%s277 + $0x8] sm:$0xff]
        %v281 = vld [vmem:[%s277 + $0x10] sm:$0xff]
        %v282 = vld [vmem:[%s277 + $0x18] sm:$0xff]
        %v283 = vld [vmem:[%s277 + $0x20] sm:$0xff]
        %v284 = vld [vmem:[%s277 + $0x28] sm:$0xff]
        %v285 = vld [vmem:[%s277 + $0x30] sm:$0xff]
        %v286 = vld [vmem:[%s277 + $0x38] sm:$0xff]
        %v287 = vld [vmem:[%s277 + $0x40] sm:$0xff]
        %v288 = vld [vmem:[%s277 + $0x48] sm:$0xff]
        %v289 = vld [vmem:[%s277 + $0x50] sm:$0xff]
        %v290 = vld [vmem:[%s277 + $0x58] sm:$0xff]
        %v291 = vld [vmem:[%s277 + $0x60] sm:$0xff]
        %v292 = vld [vmem:[%s277 + $0x68] sm:$0xff]
        %v293 = vld [vmem:[%s277 + $0x70] sm:$0xff]
        %v294 = vld [vmem:[%s277 + $0x78] sm:$0xff]
        %v295 = vpack.c.bf16 %v280, %v279
        %v296 = vpack.c.bf16 %v282, %v281
        %v297 = vpack.c.bf16 %v284, %v283
        %v298 = vpack.c.bf16 %v286, %v285
        %v299 = vpack.c.bf16 %v288, %v287
        %v300 = vpack.c.bf16 %v290, %v289
        %v301 = vpack.c.bf16 %v292, %v291
        %v302 = vpack.c.bf16 %v294, %v293
        %v303 = vld [vmem:[#allocation2] sm:$0xf]
        %v304 = vld [vmem:[#allocation2 + $0x4] sm:$0xf]
        %v305 = vld [vmem:[#allocation2 + $0x8] sm:$0xf]
        %v306 = vld [vmem:[#allocation2 + $0xc] sm:$0xf]
        %v307 = vld [vmem:[#allocation2 + $0x10] sm:$0xf]
        %v308 = vld [vmem:[#allocation2 + $0x14] sm:$0xf]
        %v309 = vld [vmem:[#allocation2 + $0x18] sm:$0xf]
        %v310 = vld [vmem:[#allocation2 + $0x1c] sm:$0xf]
        %v311 = vld [vmem:[#allocation2 + $0x20] sm:$0xf]
        %v312 = vld [vmem:[#allocation2 + $0x24] sm:$0xf]
        %v313 = vld [vmem:[#allocation2 + $0x28] sm:$0xf]
        %v314 = vld [vmem:[#allocation2 + $0x2c] sm:$0xf]
        %v315 = vld [vmem:[#allocation2 + $0x30] sm:$0xf]
        %v316 = vld [vmem:[#allocation2 + $0x34] sm:$0xf]
        %v317 = vld [vmem:[#allocation2 + $0x38] sm:$0xf]
        %v318 = vld [vmem:[#allocation2 + $0x3c] sm:$0xf]
        %v319 = vld [vmem:[%s2] sm:$0xff]
        %v320 = vld [vmem:[%s2 + $0x8] sm:$0xff]
        %v321 = vld [vmem:[%s2 + $0x10] sm:$0xff]
        %v322 = vld [vmem:[%s2 + $0x18] sm:$0xff]
        %v323 = vld [vmem:[%s2 + $0x20] sm:$0xff]
        %v324 = vld [vmem:[%s2 + $0x28] sm:$0xff]
        %v325 = vld [vmem:[%s2 + $0x30] sm:$0xff]
        %v326 = vld [vmem:[%s2 + $0x38] sm:$0xff]
        %v327 = vld [vmem:[%s2 + $0x40] sm:$0xff]
        %v328 = vld [vmem:[%s2 + $0x48] sm:$0xff]
        %v329 = vld [vmem:[%s2 + $0x50] sm:$0xff]
        %v330 = vld [vmem:[%s2 + $0x58] sm:$0xff]
        %v331 = vld [vmem:[%s2 + $0x60] sm:$0xff]
        %v332 = vld [vmem:[%s2 + $0x68] sm:$0xff]
        %v333 = vld [vmem:[%s2 + $0x70] sm:$0xff]
        %v334 = vld [vmem:[%s2 + $0x78] sm:$0xff]
        %336 = vset.pattern.permute.xlu0 0
        %337 = vperm.xlu0 %336, %v319
        %v338 = vpop.permute.xlu0 %337
        %341 = vset.pattern.permute.xlu0 0
        %342 = vperm.xlu0 %341, %v320
        %v343 = vpop.permute.xlu0 %342
        %346 = vset.pattern.permute.xlu0 0
        %347 = vperm.xlu0 %346, %v321
        %v348 = vpop.permute.xlu0 %347
        %351 = vset.pattern.permute.xlu0 0
        %352 = vperm.xlu0 %351, %v322
        %v353 = vpop.permute.xlu0 %352
        %356 = vset.pattern.permute.xlu0 0
        %357 = vperm.xlu0 %356, %v323
        %v358 = vpop.permute.xlu0 %357
        %361 = vset.pattern.permute.xlu0 0
        %362 = vperm.xlu0 %361, %v324
        %v363 = vpop.permute.xlu0 %362
        %366 = vset.pattern.permute.xlu0 0
        %367 = vperm.xlu0 %366, %v325
        %v368 = vpop.permute.xlu0 %367
        %371 = vset.pattern.permute.xlu0 0
        %372 = vperm.xlu0 %371, %v326
        %v373 = vpop.permute.xlu0 %372
        %376 = vset.pattern.permute.xlu0 0
        %377 = vperm.xlu0 %376, %v327
        %v378 = vpop.permute.xlu0 %377
        %381 = vset.pattern.permute.xlu0 0
        %382 = vperm.xlu0 %381, %v328
        %v383 = vpop.permute.xlu0 %382
        %386 = vset.pattern.permute.xlu0 0
        %387 = vperm.xlu0 %386, %v329
        %v388 = vpop.permute.xlu0 %387
        %391 = vset.pattern.permute.xlu0 0
        %392 = vperm.xlu0 %391, %v330
        %v393 = vpop.permute.xlu0 %392
        %396 = vset.pattern.permute.xlu0 0
        %397 = vperm.xlu0 %396, %v331
        %v398 = vpop.permute.xlu0 %397
        %401 = vset.pattern.permute.xlu0 0
        %402 = vperm.xlu0 %401, %v332
        %v403 = vpop.permute.xlu0 %402
        %406 = vset.pattern.permute.xlu0 0
        %407 = vperm.xlu0 %406, %v333
        %v408 = vpop.permute.xlu0 %407
        %411 = vset.pattern.permute.xlu0 0
        %412 = vperm.xlu0 %411, %v334
        %v413 = vpop.permute.xlu0 %412
        %v431 = vunpack.c.l.b16 %v303
        %v432 = vunpack.c.l.b16 %v304
        %v433 = vunpack.c.l.b16 %v305
        %v434 = vunpack.c.l.b16 %v306
        %v435 = vunpack.c.l.b16 %v307
        %v436 = vunpack.c.l.b16 %v308
        %v437 = vunpack.c.l.b16 %v309
        %v438 = vunpack.c.l.b16 %v310
        %v439 = vunpack.c.l.b16 %v311
        %v440 = vunpack.c.l.b16 %v312
        %v441 = vunpack.c.l.b16 %v313
        %v442 = vunpack.c.l.b16 %v314
        %v443 = vunpack.c.l.b16 %v315
        %v444 = vunpack.c.l.b16 %v316
        %v445 = vunpack.c.l.b16 %v317
        %v446 = vunpack.c.l.b16 %v318
        %v447 = vpack.c.b16 %v432, %v431
        %v448 = vpack.c.b16 %v434, %v433
        %v449 = vpack.c.b16 %v436, %v435
        %v450 = vpack.c.b16 %v438, %v437
        %v451 = vpack.c.b16 %v440, %v439
        %v452 = vpack.c.b16 %v442, %v441
        %v453 = vpack.c.b16 %v444, %v443
        %v454 = vpack.c.b16 %v446, %v445
        %463 = vmatprep.subr.bf16.mxu0 0
        %464 = vmatpush1.bf16.msra.mxu0 %v302
        %465 = vmatprep.subr.bf16.mxu0 0
        %466 = vmatpush1.bf16.msra.mxu0 %v301
        %467 = vmatprep.subr.bf16.mxu0 0
        %468 = vmatpush1.bf16.msra.mxu0 %v300
        %469 = vmatprep.subr.bf16.mxu0 0
        %470 = vmatpush1.bf16.msra.mxu0 %v299
        %471 = vmatprep.subr.bf16.mxu0 0
        %472 = vmatpush1.bf16.msra.mxu0 %v298
        %473 = vmatprep.subr.bf16.mxu0 0
        %474 = vmatpush1.bf16.msra.mxu0 %v297
        %475 = vmatprep.subr.bf16.mxu0 0
        %476 = vmatpush1.bf16.msra.mxu0 %v296
        %477 = vmatprep.subr.bf16.mxu0 0
        %478 = vmatpush1.bf16.msra.mxu0 %v295
        %479 = vmatprep.subr.bf16.mxu0 0
        %480 = vmatpush2.bf16.msra.mxu0 0
        %481 = vmatprep.subr.bf16.mxu0 0
        %482 = vmatpush2.bf16.msra.mxu0 0
        %483 = vmatprep.subr.bf16.mxu0 0
        %484 = vmatpush2.bf16.msra.mxu0 0
        %485 = vmatprep.subr.bf16.mxu0 0
        %486 = vmatpush2.bf16.msra.mxu0 0
        %487 = vmatprep.subr.bf16.mxu0 0
        %488 = vmatpush2.bf16.msra.mxu0 0
        %489 = vmatprep.subr.bf16.mxu0 0
        %490 = vmatpush2.bf16.msra.mxu0 0
        %491 = vmatprep.subr.bf16.mxu0 0
        %492 = vmatpush2.bf16.msra.mxu0 0
        %493 = vmatprep.subr.bf16.mxu0 0
        %494 = vmatpush2.bf16.msra.mxu0 0
        %495 = vmatprep.mubr.bf16.mxu0 0
        %496 = vmatmul.mubr.bf16.gmra.mxu0 %v447
        %v497 = vpop.f32.mrf.mxu0
        %v498 = vadd.f32 %v338, %v497
        %v499 = vpop.f32.mrf.mxu0
        %v500 = vpop.f32.mrf.mxu0
        %v501 = vadd.f32 %v343, %v500
        %v502 = vpop.f32.mrf.mxu0
        %503 = vmatprep.mubr.bf16.mxu0 0
        %504 = vmatmul.mubr.bf16.gmra.mxu0 %v448
        %v505 = vpop.f32.mrf.mxu0
        %v506 = vadd.f32 %v348, %v505
        %v507 = vpop.f32.mrf.mxu0
        %v508 = vpop.f32.mrf.mxu0
        %v509 = vadd.f32 %v353, %v508
        %v510 = vpop.f32.mrf.mxu0
        %511 = vmatprep.mubr.bf16.mxu0 0
        %512 = vmatmul.mubr.bf16.gmra.mxu0 %v449
        %v513 = vpop.f32.mrf.mxu0
        %v514 = vadd.f32 %v358, %v513
        %v515 = vpop.f32.mrf.mxu0
        %v516 = vpop.f32.mrf.mxu0
        %v517 = vadd.f32 %v363, %v516
        %v518 = vpop.f32.mrf.mxu0
        %519 = vmatprep.mubr.bf16.mxu0 0
        %520 = vmatmul.mubr.bf16.gmra.mxu0 %v450
        %v521 = vpop.f32.mrf.mxu0
        %v522 = vadd.f32 %v368, %v521
        %v523 = vpop.f32.mrf.mxu0
        %v524 = vpop.f32.mrf.mxu0
        %v525 = vadd.f32 %v373, %v524
        %v526 = vpop.f32.mrf.mxu0
        %527 = vmatprep.mubr.bf16.mxu0 0
        %528 = vmatmul.mubr.bf16.gmra.mxu0 %v451
        %v529 = vpop.f32.mrf.mxu0
        %v530 = vadd.f32 %v378, %v529
        %v531 = vpop.f32.mrf.mxu0
        %v532 = vpop.f32.mrf.mxu0
        %v533 = vadd.f32 %v383, %v532
        %v534 = vpop.f32.mrf.mxu0
        %535 = vmatprep.mubr.bf16.mxu0 0
        %536 = vmatmul.mubr.bf16.gmra.mxu0 %v452
        %v537 = vpop.f32.mrf.mxu0
        %v538 = vadd.f32 %v388, %v537
        %v539 = vpop.f32.mrf.mxu0
        %v540 = vpop.f32.mrf.mxu0
        %v541 = vadd.f32 %v393, %v540
        %v542 = vpop.f32.mrf.mxu0
        %543 = vmatprep.mubr.bf16.mxu0 0
        %544 = vmatmul.mubr.bf16.gmra.mxu0 %v453
        %v545 = vpop.f32.mrf.mxu0
        %v546 = vadd.f32 %v398, %v545
        %v547 = vpop.f32.mrf.mxu0
        %v548 = vpop.f32.mrf.mxu0
        %v549 = vadd.f32 %v403, %v548
        %v550 = vpop.f32.mrf.mxu0
        %551 = vmatprep.mubr.bf16.mxu0 0
        %552 = vmatmul.mubr.bf16.gmra.mxu0 %v454
        %v553 = vpop.f32.mrf.mxu0
        %v554 = vadd.f32 %v408, %v553
        %v555 = vpop.f32.mrf.mxu0
        %v556 = vpop.f32.mrf.mxu0
        %v557 = vadd.f32 %v413, %v556
        %v558 = vpop.f32.mrf.mxu0
        %559 = vdwg.mxu0
        %v560 = vmax.f32 %v498, 0.0
        %v561 = vmax.f32 %v501, 0.0
        %v562 = vmax.f32 %v506, 0.0
        %v563 = vmax.f32 %v509, 0.0
        %v564 = vmax.f32 %v514, 0.0
        %v565 = vmax.f32 %v517, 0.0
        %v566 = vmax.f32 %v522, 0.0
        %v567 = vmax.f32 %v525, 0.0
        %v568 = vmax.f32 %v530, 0.0
        %v569 = vmax.f32 %v533, 0.0
        %v570 = vmax.f32 %v538, 0.0
        %v571 = vmax.f32 %v541, 0.0
        %v572 = vmax.f32 %v546, 0.0
        %v573 = vmax.f32 %v549, 0.0
        %v574 = vmax.f32 %v554, 0.0
        %v575 = vmax.f32 %v557, 0.0
        %v576 = vld [vmem:[#allocation5] sm:$0xf]
        %v577 = vld [vmem:[#allocation5 + $0x4] sm:$0xf]
        %v578 = vld [vmem:[#allocation5 + $0x8] sm:$0xf]
        %v579 = vld [vmem:[#allocation5 + $0xc] sm:$0xf]
        %v580 = vld [vmem:[#allocation5 + $0x10] sm:$0xf]
        %v581 = vld [vmem:[#allocation5 + $0x14] sm:$0xf]
        %v582 = vld [vmem:[#allocation5 + $0x18] sm:$0xf]
        %v583 = vld [vmem:[#allocation5 + $0x1c] sm:$0xf]
        %v584 = vld [vmem:[#allocation5 + $0x20] sm:$0xf]
        %v585 = vld [vmem:[#allocation5 + $0x24] sm:$0xf]
        %v586 = vld [vmem:[#allocation5 + $0x28] sm:$0xf]
        %v587 = vld [vmem:[#allocation5 + $0x2c] sm:$0xf]
        %v588 = vld [vmem:[#allocation5 + $0x30] sm:$0xf]
        %v589 = vld [vmem:[#allocation5 + $0x34] sm:$0xf]
        %v590 = vld [vmem:[#allocation5 + $0x38] sm:$0xf]
        %v591 = vld [vmem:[#allocation5 + $0x3c] sm:$0xf]
        %v592 = vpack.c.bf16 %v561, %v560
        %v593 = vpack.c.bf16 %v563, %v562
        %v594 = vpack.c.bf16 %v565, %v564
        %v595 = vpack.c.bf16 %v567, %v566
        %v596 = vpack.c.bf16 %v569, %v568
        %v597 = vpack.c.bf16 %v571, %v570
        %v598 = vpack.c.bf16 %v573, %v572
        %v599 = vpack.c.bf16 %v575, %v574
        %v600 = vld [vmem:[%s4] sm:$0xff]
        %v601 = vld [vmem:[%s4 + $0x8] sm:$0xff]
        %v602 = vld [vmem:[%s4 + $0x10] sm:$0xff]
        %v603 = vld [vmem:[%s4 + $0x18] sm:$0xff]
        %v604 = vld [vmem:[%s4 + $0x20] sm:$0xff]
        %v605 = vld [vmem:[%s4 + $0x28] sm:$0xff]
        %v606 = vld [vmem:[%s4 + $0x30] sm:$0xff]
        %v607 = vld [vmem:[%s4 + $0x38] sm:$0xff]
        %v608 = vld [vmem:[%s4 + $0x40] sm:$0xff]
        %v609 = vld [vmem:[%s4 + $0x48] sm:$0xff]
        %v610 = vld [vmem:[%s4 + $0x50] sm:$0xff]
        %v611 = vld [vmem:[%s4 + $0x58] sm:$0xff]
        %v612 = vld [vmem:[%s4 + $0x60] sm:$0xff]
        %v613 = vld [vmem:[%s4 + $0x68] sm:$0xff]
        %v614 = vld [vmem:[%s4 + $0x70] sm:$0xff]
        %v615 = vld [vmem:[%s4 + $0x78] sm:$0xff]
        %617 = vset.pattern.permute.xlu0 0
        %618 = vperm.xlu0 %617, %v600
        %v619 = vpop.permute.xlu0 %618
        %622 = vset.pattern.permute.xlu0 0
        %623 = vperm.xlu0 %622, %v601
        %v624 = vpop.permute.xlu0 %623
        %627 = vset.pattern.permute.xlu0 0
        %628 = vperm.xlu0 %627, %v602
        %v629 = vpop.permute.xlu0 %628
        %632 = vset.pattern.permute.xlu0 0
        %633 = vperm.xlu0 %632, %v603
        %v634 = vpop.permute.xlu0 %633
        %637 = vset.pattern.permute.xlu0 0
        %638 = vperm.xlu0 %637, %v604
        %v639 = vpop.permute.xlu0 %638
        %642 = vset.pattern.permute.xlu0 0
        %643 = vperm.xlu0 %642, %v605
        %v644 = vpop.permute.xlu0 %643
        %647 = vset.pattern.permute.xlu0 0
        %648 = vperm.xlu0 %647, %v606
        %v649 = vpop.permute.xlu0 %648
        %652 = vset.pattern.permute.xlu0 0
        %653 = vperm.xlu0 %652, %v607
        %v654 = vpop.permute.xlu0 %653
        %657 = vset.pattern.permute.xlu0 0
        %658 = vperm.xlu0 %657, %v608
        %v659 = vpop.permute.xlu0 %658
        %662 = vset.pattern.permute.xlu0 0
        %663 = vperm.xlu0 %662, %v609
        %v664 = vpop.permute.xlu0 %663
        %667 = vset.pattern.permute.xlu0 0
        %668 = vperm.xlu0 %667, %v610
        %v669 = vpop.permute.xlu0 %668
        %672 = vset.pattern.permute.xlu0 0
        %673 = vperm.xlu0 %672, %v611
        %v674 = vpop.permute.xlu0 %673
        %677 = vset.pattern.permute.xlu0 0
        %678 = vperm.xlu0 %677, %v612
        %v679 = vpop.permute.xlu0 %678
        %682 = vset.pattern.permute.xlu0 0
        %683 = vperm.xlu0 %682, %v613
        %v684 = vpop.permute.xlu0 %683
        %687 = vset.pattern.permute.xlu0 0
        %688 = vperm.xlu0 %687, %v614
        %v689 = vpop.permute.xlu0 %688
        %692 = vset.pattern.permute.xlu0 0
        %693 = vperm.xlu0 %692, %v615
        %v694 = vpop.permute.xlu0 %693
        %v712 = vunpack.c.l.b16 %v576
        %v713 = vunpack.c.l.b16 %v577
        %v714 = vunpack.c.l.b16 %v578
        %v715 = vunpack.c.l.b16 %v579
        %v716 = vunpack.c.l.b16 %v580
        %v717 = vunpack.c.l.b16 %v581
        %v718 = vunpack.c.l.b16 %v582
        %v719 = vunpack.c.l.b16 %v583
        %v720 = vunpack.c.l.b16 %v584
        %v721 = vunpack.c.l.b16 %v585
        %v722 = vunpack.c.l.b16 %v586
        %v723 = vunpack.c.l.b16 %v587
        %v724 = vunpack.c.l.b16 %v588
        %v725 = vunpack.c.l.b16 %v589
        %v726 = vunpack.c.l.b16 %v590
        %v727 = vunpack.c.l.b16 %v591
        %v728 = vpack.c.b16 %v713, %v712
        %v729 = vpack.c.b16 %v715, %v714
        %v730 = vpack.c.b16 %v717, %v716
        %v731 = vpack.c.b16 %v719, %v718
        %v732 = vpack.c.b16 %v721, %v720
        %v733 = vpack.c.b16 %v723, %v722
        %v734 = vpack.c.b16 %v725, %v724
        %v735 = vpack.c.b16 %v727, %v726
        %744 = vmatprep.subr.bf16.mxu0 0
        %745 = vmatpush1.bf16.msra.mxu0 %v599
        %746 = vmatprep.subr.bf16.mxu0 0
        %747 = vmatpush1.bf16.msra.mxu0 %v598
        %748 = vmatprep.subr.bf16.mxu0 0
        %749 = vmatpush1.bf16.msra.mxu0 %v597
        %750 = vmatprep.subr.bf16.mxu0 0
        %751 = vmatpush1.bf16.msra.mxu0 %v596
        %752 = vmatprep.subr.bf16.mxu0 0
        %753 = vmatpush1.bf16.msra.mxu0 %v595
        %754 = vmatprep.subr.bf16.mxu0 0
        %755 = vmatpush1.bf16.msra.mxu0 %v594
        %756 = vmatprep.subr.bf16.mxu0 0
        %757 = vmatpush1.bf16.msra.mxu0 %v593
        %758 = vmatprep.subr.bf16.mxu0 0
        %759 = vmatpush1.bf16.msra.mxu0 %v592
        %760 = vmatprep.subr.bf16.mxu0 0
        %761 = vmatpush2.bf16.msra.mxu0 0
        %762 = vmatprep.subr.bf16.mxu0 0
        %763 = vmatpush2.bf16.msra.mxu0 0
        %764 = vmatprep.subr.bf16.mxu0 0
        %765 = vmatpush2.bf16.msra.mxu0 0
        %766 = vmatprep.subr.bf16.mxu0 0
        %767 = vmatpush2.bf16.msra.mxu0 0
        %768 = vmatprep.subr.bf16.mxu0 0
        %769 = vmatpush2.bf16.msra.mxu0 0
        %770 = vmatprep.subr.bf16.mxu0 0
        %771 = vmatpush2.bf16.msra.mxu0 0
        %772 = vmatprep.subr.bf16.mxu0 0
        %773 = vmatpush2.bf16.msra.mxu0 0
        %774 = vmatprep.subr.bf16.mxu0 0
        %775 = vmatpush2.bf16.msra.mxu0 0
        %776 = vmatprep.mubr.bf16.mxu0 0
        %777 = vmatmul.mubr.bf16.gmra.mxu0 %v728
        %v778 = vpop.f32.mrf.mxu0
        %v779 = vadd.f32 %v619, %v778
        %v780 = vpop.f32.mrf.mxu0
        %v781 = vpop.f32.mrf.mxu0
        %v782 = vadd.f32 %v624, %v781
        %v783 = vpop.f32.mrf.mxu0
        %784 = vmatprep.mubr.bf16.mxu0 0
        %785 = vmatmul.mubr.bf16.gmra.mxu0 %v729
        %v786 = vpop.f32.mrf.mxu0
        %v787 = vadd.f32 %v629, %v786
        %v788 = vpop.f32.mrf.mxu0
        %v789 = vpop.f32.mrf.mxu0
        %v790 = vadd.f32 %v634, %v789
        %v791 = vpop.f32.mrf.mxu0
        %792 = vmatprep.mubr.bf16.mxu0 0
        %793 = vmatmul.mubr.bf16.gmra.mxu0 %v730
        %v794 = vpop.f32.mrf.mxu0
        %v795 = vadd.f32 %v639, %v794
        %v796 = vpop.f32.mrf.mxu0
        %v797 = vpop.f32.mrf.mxu0
        %v798 = vadd.f32 %v644, %v797
        %v799 = vpop.f32.mrf.mxu0
        %800 = vmatprep.mubr.bf16.mxu0 0
        %801 = vmatmul.mubr.bf16.gmra.mxu0 %v731
        %v802 = vpop.f32.mrf.mxu0
        %v803 = vadd.f32 %v649, %v802
        %v804 = vpop.f32.mrf.mxu0
        %v805 = vpop.f32.mrf.mxu0
        %v806 = vadd.f32 %v654, %v805
        %v807 = vpop.f32.mrf.mxu0
        %808 = vmatprep.mubr.bf16.mxu0 0
        %809 = vmatmul.mubr.bf16.gmra.mxu0 %v732
        %v810 = vpop.f32.mrf.mxu0
        %v811 = vadd.f32 %v659, %v810
        %v812 = vpop.f32.mrf.mxu0
        %v813 = vpop.f32.mrf.mxu0
        %v814 = vadd.f32 %v664, %v813
        %v815 = vpop.f32.mrf.mxu0
        %816 = vmatprep.mubr.bf16.mxu0 0
        %817 = vmatmul.mubr.bf16.gmra.mxu0 %v733
        %v818 = vpop.f32.mrf.mxu0
        %v819 = vadd.f32 %v669, %v818
        %v820 = vpop.f32.mrf.mxu0
        %v821 = vpop.f32.mrf.mxu0
        %v822 = vadd.f32 %v674, %v821
        %v823 = vpop.f32.mrf.mxu0
        %824 = vmatprep.mubr.bf16.mxu0 0
        %825 = vmatmul.mubr.bf16.gmra.mxu0 %v734
        %v826 = vpop.f32.mrf.mxu0
        %v827 = vadd.f32 %v679, %v826
        %v828 = vpop.f32.mrf.mxu0
        %v829 = vpop.f32.mrf.mxu0
        %v830 = vadd.f32 %v684, %v829
        %v831 = vpop.f32.mrf.mxu0
        %832 = vmatprep.mubr.bf16.mxu0 0
        %833 = vmatmul.mubr.bf16.gmra.mxu0 %v735
        %v834 = vpop.f32.mrf.mxu0
        %v835 = vadd.f32 %v689, %v834
        %v836 = vpop.f32.mrf.mxu0
        %v837 = vpop.f32.mrf.mxu0
        %v838 = vadd.f32 %v694, %v837
        %v839 = vpop.f32.mrf.mxu0
        %840 = vdwg.mxu0
        %841 = vst [vmem:[%s269] sm:$0xff] %v779
        %842 = vst [vmem:[%s269 + $0x8] sm:$0xff] %v782
        %843 = vst [vmem:[%s269 + $0x10] sm:$0xff] %v787
        %844 = vst [vmem:[%s269 + $0x18] sm:$0xff] %v790
        %845 = vst [vmem:[%s269 + $0x20] sm:$0xff] %v795
        %846 = vst [vmem:[%s269 + $0x28] sm:$0xff] %v798
        %847 = vst [vmem:[%s269 + $0x30] sm:$0xff] %v803
        %848 = vst [vmem:[%s269 + $0x38] sm:$0xff] %v806
        %849 = vst [vmem:[%s269 + $0x40] sm:$0xff] %v811
        %850 = vst [vmem:[%s269 + $0x48] sm:$0xff] %v814
        %851 = vst [vmem:[%s269 + $0x50] sm:$0xff] %v819
        %852 = vst [vmem:[%s269 + $0x58] sm:$0xff] %v822
        %853 = vst [vmem:[%s269 + $0x60] sm:$0xff] %v827
        %854 = vst [vmem:[%s269 + $0x68] sm:$0xff] %v830
        %855 = vst [vmem:[%s269 + $0x70] sm:$0xff] %v835
        %856 = vst [vmem:[%s269 + $0x78] sm:$0xff] %v838
        %s857 = sand.u32 %s155, 1
        %s858 = scalar_lea.sflag [#allocation4], %s857
        %s859 = sand.u32 %s155, 1
        %s860 = smul.addr %s859, 128
        %s861 = scalar_lea.vmem [#allocation7], %s860
        // Predicated region
        $region49: #{tpu_custom_call.1} parent=39 // pred_check
          %p862 = pneg %p165
        $region50: #{tpu_custom_call.1} parent=39 // pred_check_branch
          %864 = sbr.rel (%p862) target = $region52
        $region51: #{tpu_custom_call.1} parent=39 // pred_region
          %s866 = ssub.s32 2048, 2048
          %867 = vsyncadd %s858, %s866
          %s868 = smul.addr %s25, 16
          %s869 = sadd.s32 %s26, %s868
          %s870 = smul.addr %s869, 128
          %s871 = scalar_lea.hbm %s5, %s870
          %s872 = sshll.u32 %s861, 4
          %s873 = int_to_ptr.vmem [resolvable:$true] %s872
          %878 = dma.vmem_to_hbm [thread:$0]  %s873, 2048, %s871, %s858, 128, 128, 8
        $region52: #{tpu_custom_call.1} parent=39 // pred_fallthru
          _
      $region40: #{tpu_custom_call.1} parent=5 // pred_fallthru
        _
      %p879 = scmp.le.s32.totalorder 2, %s16
      // Predicated region
      $region53: #{tpu_custom_call.1} parent=5 // pred_check
        %p880 = pneg %p879
      $region54: #{tpu_custom_call.1} parent=5 // pred_check_branch
        %882 = sbr.rel (%p880) target = $region56
      $region55: #{tpu_custom_call.1} parent=5 // pred_region
        %s883 = ssub.s32 %s16, 2
        // Predicated region
        $region57: #{tpu_custom_call.1} parent=55 // pred_check
          %p884 = pneg %p171
        $region58: #{tpu_custom_call.1} parent=55 // pred_check_branch
          %886 = sbr.rel (%p884) target = $region60
        $region59: #{tpu_custom_call.1} parent=55 // pred_region
          %s887 = sand.u32 %s156, 1
          %s888 = scalar_lea.sflag [#allocation4], %s887
          %s889 = sand.u32 %s156, 1
          %s890 = smul.addr %s889, 128
          %s891 = scalar_lea.vmem [#allocation7], %s890
          %892 = dma.done %s888, 2048
        $region60: #{tpu_custom_call.1} parent=55 // pred_fallthru
          _
      $region56: #{tpu_custom_call.1} parent=5 // pred_fallthru
        _
    $region6: #{tpu_custom_call.1} parent=1 // loop_footer
      %s20 = sadd.s32 1, %s16
    $region7: #{tpu_custom_call.1} parent=1 // loop_footer_branch
      %15 = sbr.rel target = $region3
    $region8: #{tpu_custom_call.1} parent=1 // loop_exit
      _
    %893 = vsyncpa [#allocation3], 1
    %s894 = scalar_lea.sflag [#allocation3], 1
    %895 = vsyncpa %s894, 1
    %896 = vsyncpa [#allocation6], 1
    %897 = vsyncpa [#allocation4], 1
    %s898 = scalar_lea.sflag [#allocation4], 1
    %899 = vsyncpa %s898, 1

</llo_original>
